<compile_context>
chip_gen: v7x
topology: tpu7x:2x2x1
jax: 0.10.0
libtpu: 0.0.40
codegen_flags: <defaults>
</compile_context>

<pallas_src>
import jax
import jax.numpy as jnp
from jax.experimental import pallas as pl
from jax.experimental.pallas import tpu as pltpu


def channel_attention_kernel(x_ref, w1t_ref, w2t_ref, o_ref):
    # x_ref:   VMEM (Nb, C, H*W)  -- block of Nb images, lane-dense spatial axis
    # w1t_ref: VMEM (C, C)        -- fc1 weight, pre-transposed (in, out)
    # w2t_ref: VMEM (C, C)        -- fc2 weight, pre-transposed (in, out)
    # o_ref:   VMEM (Nb, C)       -- sigmoid(channel attention) for the block
    x = x_ref[...].astype(jnp.float32)
    hw = x.shape[-1]

    # Global average / max pool over the lane-dense H*W axis.
    avg = jnp.sum(x, axis=-1) * (1.0 / hw)   # (Nb, C)
    mx = jnp.max(x, axis=-1)                 # (Nb, C)

    w1t = w1t_ref[...]
    w2t = w2t_ref[...]

    # Shared MLP applied to both pooled vectors: 1x1 convs are plain (C, C)
    # matmuls on the (Nb, C) pooled features.  Two independent chains -> ILP.
    h_avg = jnp.maximum(
        jnp.dot(avg, w1t, preferred_element_type=jnp.float32), 0.0)
    h_max = jnp.maximum(
        jnp.dot(mx, w1t, preferred_element_type=jnp.float32), 0.0)
    out = (jnp.dot(h_avg, w2t, preferred_element_type=jnp.float32)
           + jnp.dot(h_max, w2t, preferred_element_type=jnp.float32))

    o_ref[...] = jax.nn.sigmoid(out).astype(o_ref.dtype)


def channel_attention(x, fc1_weight, fc2_weight, *, target_block_bytes=2 << 20):
    """x: (N, C, H, W) f32; fc{1,2}_weight: (C, C, 1, 1) f32 -> (N, C, 1, 1) f32."""
    N, C, H, W = x.shape
    HW = H * W

    x2 = x.reshape(N, C, HW).astype(jnp.float32)
    # Conv2d(C, C, 1, bias=False): y[o] = sum_i W[o, i] * v[i]  ->  v @ W.T
    w1t = fc1_weight.reshape(C, C).T.astype(jnp.float32)
    w2t = fc2_weight.reshape(C, C).T.astype(jnp.float32)

    # Batch-block size: amortize per-grid-step overhead by moving ~1-4 MB per
    # step; keep Nb a divisor of N so no padded (garbage) blocks are ever read.
    per_image_bytes = C * HW * 4
    nb = max(1, min(N, target_block_bytes // max(per_image_bytes, 1)))
    while N % nb:
        nb -= 1
    grid_len = N // nb
    # Note: for very large feature maps (C*H*W*4 >> VMEM) one would add an H*W
    # reduction grid axis with running sum/max accumulators in VMEM scratch.

    x_spec_kwargs = {}
    if grid_len >= 3:
        # Deeper input buffering once there are enough blocks to pipeline.
        x_spec_kwargs["pipeline_mode"] = pl.Buffered(3)

    cost = pl.CostEstimate(
        flops=2 * N * C * HW + 8 * N * C * C,
        transcendentals=N * C,
        bytes_accessed=N * C * HW * 4 + 2 * C * C * 4 + N * C * 4,
    )

    out = pl.pallas_call(
        channel_attention_kernel,
        out_shape=jax.ShapeDtypeStruct((grid_len, nb, C), jnp.float32),
        grid=(grid_len,),
        in_specs=[
            # One block of Nb full images per step; (C, HW) equal the full
            # array dims so any H, W, C are legal block shapes.
            pl.BlockSpec((nb, C, HW), lambda b: (b, 0, 0), **x_spec_kwargs),
            # Small weights: resident VMEM blocks, same tile every step.
            pl.BlockSpec((C, C), lambda b: (0, 0)),
            pl.BlockSpec((C, C), lambda b: (0, 0)),
        ],
        out_specs=pl.BlockSpec((None, nb, C), lambda b: (b, 0, 0)),
        compiler_params=pltpu.CompilerParams(
            dimension_semantics=("parallel",)),
        cost_estimate=cost,
    )(x2, w1t, w2t)

    return out.reshape(N, C, 1, 1)


if __name__ == "__main__":
    key = jax.random.PRNGKey(0)
    kx, k1, k2 = jax.random.split(key, 3)

    # small shapes consistent with the module's forward
    N, C, H, W = 2, 32, 16, 16
    x = jax.random.normal(kx, (N, C, H, W), jnp.float32)

    # deterministic Conv2d(C, C, 1, bias=False) weights (kaiming-uniform-like)
    bound = (1.0 / C) ** 0.5
    fc1_w = jax.random.uniform(k1, (C, C, 1, 1), jnp.float32, -bound, bound)
    fc2_w = jax.random.uniform(k2, (C, C, 1, 1), jnp.float32, -bound, bound)

    out = channel_attention(x, fc1_w, fc2_w)
    jax.block_until_ready(out)

    # plain-JAX reference for the module's forward
    w1m = fc1_w.reshape(C, C)
    w2m = fc2_w.reshape(C, C)
    avg = jnp.mean(x, axis=(2, 3))   # AdaptiveAvgPool2d(1)
    mx = jnp.max(x, axis=(2, 3))     # AdaptiveMaxPool2d(1)

    def mlp(v):
        return jnp.maximum(v @ w1m.T, 0.0) @ w2m.T   # fc2(relu(fc1(.)))

    ref = jax.nn.sigmoid(mlp(avg) + mlp(mx)).reshape(N, C, 1, 1)

    assert out.shape == (N, C, 1, 1)
    assert jnp.allclose(out, ref, atol=1e-5, rtol=1e-5)

    print("KERNEL_OK")
</pallas_src>

<mosaic_0001>
module attributes {stable_mosaic.version = 11 : i64} {
  func.func @channel_attention_kernel(%arg0: i32, %arg1: memref<2x32x256xf32, #tpu.memory_space<vmem>>, %arg2: memref<32x32xf32, #tpu.memory_space<vmem>>, %arg3: memref<32x32xf32, #tpu.memory_space<vmem>>, %arg4: memref<1x2x32xf32, #tpu.memory_space<vmem>>) attributes {dimension_semantics = [#tpu.dimension_semantics<parallel>], iteration_bounds = array<i64: 1>, scalar_prefetch = 0 : i64, scratch_operands = 0 : i64, tpu.core_type = #tpu.core_type<tc>, window_params = [{transform_indices = @transform_0, window_bounds = array<i64: 2, 32, 256>}, {pipeline_mode = #tpu.pipeline_mode<synchronous>, transform_indices = @transform_1, window_bounds = array<i64: 32, 32>}, {pipeline_mode = #tpu.pipeline_mode<synchronous>, transform_indices = @transform_2, window_bounds = array<i64: 32, 32>}, {transform_indices = @transform_3, window_bounds = array<i64: 1, 2, 32>}]} {
    %c0 = arith.constant 0 : index
    %c0_0 = arith.constant 0 : index
    %c0_1 = arith.constant 0 : index
    %0 = vector.load %arg1[%c0, %c0_0, %c0_1] : memref<2x32x256xf32, #tpu.memory_space<vmem>>, vector<2x32x256xf32>
    %cst = arith.constant dense<0.000000e+00> : vector<2x32xf32>
    %1 = vector.multi_reduction <add>, %0, %cst [2] : vector<2x32x256xf32> to vector<2x32xf32>
    %cst_2 = arith.constant 3.906250e-03 : f32
    %2 = vector.broadcast %cst_2 : f32 to vector<2x32xf32>
    %3 = arith.mulf %1, %2 : vector<2x32xf32>
    %cst_3 = arith.constant dense<0xFF800000> : vector<2x32xf32>
    %4 = vector.multi_reduction <maximumf>, %0, %cst_3 [2] : vector<2x32x256xf32> to vector<2x32xf32>
    %c0_4 = arith.constant 0 : index
    %c0_5 = arith.constant 0 : index
    %5 = vector.load %arg2[%c0_4, %c0_5] : memref<32x32xf32, #tpu.memory_space<vmem>>, vector<32x32xf32>
    %c0_6 = arith.constant 0 : index
    %c0_7 = arith.constant 0 : index
    %6 = vector.load %arg3[%c0_6, %c0_7] : memref<32x32xf32, #tpu.memory_space<vmem>>, vector<32x32xf32>
    %cst_8 = arith.constant dense<0.000000e+00> : vector<2x32xf32>
    %7 = tpu.matmul %3, %5, %cst_8 {dimension_numbers = #tpu.dot_dimension_numbers<[1], [0], [0], [1], [0, 0, 1, 1], [], []>} : vector<2x32xf32>, vector<32x32xf32>, vector<2x32xf32> -> vector<2x32xf32>
    %cst_9 = arith.constant 0.000000e+00 : f32
    %8 = vector.broadcast %cst_9 : f32 to vector<2x32xf32>
    %9 = arith.maximumf %7, %8 : vector<2x32xf32>
    %cst_10 = arith.constant dense<0.000000e+00> : vector<2x32xf32>
    %10 = tpu.matmul %4, %5, %cst_10 {dimension_numbers = #tpu.dot_dimension_numbers<[1], [0], [0], [1], [0, 0, 1, 1], [], []>} : vector<2x32xf32>, vector<32x32xf32>, vector<2x32xf32> -> vector<2x32xf32>
    %cst_11 = arith.constant 0.000000e+00 : f32
    %11 = vector.broadcast %cst_11 : f32 to vector<2x32xf32>
    %12 = arith.maximumf %10, %11 : vector<2x32xf32>
    %cst_12 = arith.constant dense<0.000000e+00> : vector<2x32xf32>
    %13 = tpu.matmul %9, %6, %cst_12 {dimension_numbers = #tpu.dot_dimension_numbers<[1], [0], [0], [1], [0, 0, 1, 1], [], []>} : vector<2x32xf32>, vector<32x32xf32>, vector<2x32xf32> -> vector<2x32xf32>
    %cst_13 = arith.constant dense<0.000000e+00> : vector<2x32xf32>
    %14 = tpu.matmul %12, %6, %cst_13 {dimension_numbers = #tpu.dot_dimension_numbers<[1], [0], [0], [1], [0, 0, 1, 1], [], []>} : vector<2x32xf32>, vector<32x32xf32>, vector<2x32xf32> -> vector<2x32xf32>
    %15 = arith.addf %13, %14 : vector<2x32xf32>
    %16 = arith.negf %15 : vector<2x32xf32>
    %17 = math.exp %16 : vector<2x32xf32>
    %cst_14 = arith.constant 1.000000e+00 : f32
    %18 = vector.broadcast %cst_14 : f32 to vector<2x32xf32>
    %19 = arith.addf %18, %17 : vector<2x32xf32>
    %20 = arith.divf %18, %19 : vector<2x32xf32>
    %c0_15 = arith.constant 0 : index
    %c0_16 = arith.constant 0 : index
    %c0_17 = arith.constant 0 : index
    %21 = vector.load %arg4[%c0_15, %c0_16, %c0_17] : memref<1x2x32xf32, #tpu.memory_space<vmem>>, vector<1x2x32xf32>
    %22 = vector.shape_cast %21 : vector<1x2x32xf32> to vector<2x32xf32>
    %23 = vector.shape_cast %20 : vector<2x32xf32> to vector<1x2x32xf32>
    tpu.vector_store %arg4[%c0_15, %c0_16, %c0_17], %23 {strides = array<i32>} : memref<1x2x32xf32, #tpu.memory_space<vmem>>, vector<1x2x32xf32>,
    return
  }
  func.func @transform_0(%arg0: i32) -> (i32, i32, i32) {
    %c0_i32 = arith.constant 0 : i32
    %c0_i32_0 = arith.constant 0 : i32
    %c0_i32_1 = arith.constant 0 : i32
    return %arg0, %c0_i32, %c0_i32_0 : i32, i32, i32
  }
  func.func @transform_1(%arg0: i32) -> (i32, i32) {
    %c0_i32 = arith.constant 0 : i32
    %c0_i32_0 = arith.constant 0 : i32
    %c0_i32_1 = arith.constant 0 : i32
    return %c0_i32, %c0_i32_0 : i32, i32
  }
  func.func @transform_2(%arg0: i32) -> (i32, i32) {
    %c0_i32 = arith.constant 0 : i32
    %c0_i32_0 = arith.constant 0 : i32
    %c0_i32_1 = arith.constant 0 : i32
    return %c0_i32, %c0_i32_0 : i32, i32
  }
  func.func @transform_3(%arg0: i32) -> (i32, i32, i32) {
    %c0_i32 = arith.constant 0 : i32
    %c0_i32_0 = arith.constant 0 : i32
    %c0_i32_1 = arith.constant 0 : i32
    return %arg0, %c0_i32, %c0_i32_0 : i32, i32, i32
  }
}

</mosaic_0001>

<llo_original>
// kernel: tpu_custom_call.1
$region0: #{tpu_custom_call.1}
  #allocation0 [shape = 'u32[]', space=smem, size = 0x4, offset = 0x4, fixed_abs, tag = 'smem constant byte address 0x4 - core index']
  #allocation1 [shape = 'u32[144,128]{1,0:T(1,128)}', space=vmem, size = 0x12000, scoped, tag = 'internal scratch']
  %s0 = inlined_call_operand.hbm [shape: f32[2,32,256], index: 0, kind: input, shape index: {}]
  %s1 = inlined_call_operand.hbm [shape: f32[32,32], index: 1, kind: input, shape index: {}]
  %s2 = inlined_call_operand.hbm [shape: f32[32,32], index: 2, kind: input, shape index: {}]
  %s3 = inlined_call_operand.hbm [shape: f32[1,2,32], index: 3, kind: output, shape index: {}]
  %s4 = sld [smem:[#allocation0]]
  $region34: #{tpu_custom_call.1} parent=0
    _
  %s6 = ssub.s32 1, %s4
  %s7 = scalar_select 0, %s6, %s4
  $region1: #{tpu_custom_call.1} parent=0
    #allocation2 [shape = 'u8[65536]{0}', space=vmem, size = 0x10000, scoped, tag = 'input window, operand 0, single buffered']
    #allocation3 [shape = 's32[1]{0}', space=sflag, size = 0x4, scoped, tag = 'scoped memory for tpu_custom_call.1']
    #allocation4 [shape = 's32[1]{0}', space=sflag, size = 0x4, scoped, tag = 'scoped memory for tpu_custom_call.1']
    #allocation5 [shape = 'u8[16384]{0}', space=vmem, size = 0x4000, scoped, tag = 'input window, operand 1, single buffered']
    #allocation6 [shape = 's32[1]{0}', space=sflag, size = 0x4, scoped, tag = 'scoped memory for tpu_custom_call.1']
    #allocation7 [shape = 'u8[16384]{0}', space=vmem, size = 0x4000, scoped, tag = 'input window, operand 2, single buffered']
    #allocation8 [shape = 'u8[1024]{0}', space=vmem, size = 0x400, scoped, tag = 'output window, operand 0, single buffered']
    %8 = vsyncpa [#allocation3], 0
    %9 = vsyncpa [#allocation6], 0
    %10 = vsyncpa [#allocation4], 0
    // Predicated region
    $region2: #{tpu_custom_call.1} parent=1 // pred_check
      _
    $region3: #{tpu_custom_call.1} parent=1 // pred_check_branch
      %12 = sbr.rel (0) target = $region5
    $region4: #{tpu_custom_call.1} parent=1 // pred_region
      %s14 = ssub.s32 2048, 2048
      %15 = vsyncadd [#allocation3], %s14
      %s16 = sshll.u32 [#allocation2], 4
      %s17 = int_to_ptr.vmem [resolvable:$true] %s16
      %22 = dma.hbm_to_vmem [thread:$0]  %s0, 2048, %s17, [#allocation3], 256, 256, 16
    $region5: #{tpu_custom_call.1} parent=1 // pred_fallthru
      _
    // Predicated region
    $region6: #{tpu_custom_call.1} parent=1 // pred_check
      _
    $region7: #{tpu_custom_call.1} parent=1 // pred_check_branch
      %24 = sbr.rel (0) target = $region9
    $region8: #{tpu_custom_call.1} parent=1 // pred_region
      %s26 = ssub.s32 512, 512
      %27 = vsyncadd [#allocation6], %s26
      %s28 = sshll.u32 [#allocation5], 4
      %s29 = int_to_ptr.vmem [resolvable:$true] %s28
      %34 = dma.hbm_to_vmem [thread:$0]  %s1, 512, %s29, [#allocation6], 128, 128, 8
    $region9: #{tpu_custom_call.1} parent=1 // pred_fallthru
      _
    // Predicated region
    $region10: #{tpu_custom_call.1} parent=1 // pred_check
      _
    $region11: #{tpu_custom_call.1} parent=1 // pred_check_branch
      %36 = sbr.rel (0) target = $region13
    $region12: #{tpu_custom_call.1} parent=1 // pred_region
      %s38 = ssub.s32 512, 512
      %39 = vsyncadd [#allocation6], %s38
      %s40 = sshll.u32 [#allocation7], 4
      %s41 = int_to_ptr.vmem [resolvable:$true] %s40
      %46 = dma.hbm_to_vmem [thread:$0]  %s2, 512, %s41, [#allocation6], 128, 128, 8
    $region13: #{tpu_custom_call.1} parent=1 // pred_fallthru
      _
    // Predicated region
    $region14: #{tpu_custom_call.1} parent=1 // pred_check
      _
    $region15: #{tpu_custom_call.1} parent=1 // pred_check_branch
      %48 = sbr.rel (0) target = $region17
    $region16: #{tpu_custom_call.1} parent=1 // pred_region
      %49 = dma.done [#allocation3], 2048
    $region17: #{tpu_custom_call.1} parent=1 // pred_fallthru
      _
    // Predicated region
    $region18: #{tpu_custom_call.1} parent=1 // pred_check
      _
    $region19: #{tpu_custom_call.1} parent=1 // pred_check_branch
      %51 = sbr.rel (0) target = $region21
    $region20: #{tpu_custom_call.1} parent=1 // pred_region
      %52 = dma.done [#allocation6], 512
    $region21: #{tpu_custom_call.1} parent=1 // pred_fallthru
      _
    // Predicated region
    $region22: #{tpu_custom_call.1} parent=1 // pred_check
      _
    $region23: #{tpu_custom_call.1} parent=1 // pred_check_branch
      %54 = sbr.rel (0) target = $region25
    $region24: #{tpu_custom_call.1} parent=1 // pred_region
      %55 = dma.done [#allocation6], 512
    $region25: #{tpu_custom_call.1} parent=1 // pred_fallthru
      _
    %v56 = vld [vmem:[#allocation2] sm:$0xff]
    %v57 = vld [vmem:[#allocation2 + $0x8] sm:$0xff]
    %v58 = vld [vmem:[#allocation2 + $0x10] sm:$0xff]
    %v59 = vld [vmem:[#allocation2 + $0x18] sm:$0xff]
    %v60 = vld [vmem:[#allocation2 + $0x20] sm:$0xff]
    %v61 = vld [vmem:[#allocation2 + $0x28] sm:$0xff]
    %v62 = vld [vmem:[#allocation2 + $0x30] sm:$0xff]
    %v63 = vld [vmem:[#allocation2 + $0x38] sm:$0xff]
    %v64 = vld [vmem:[#allocation2 + $0x40] sm:$0xff]
    %v65 = vld [vmem:[#allocation2 + $0x48] sm:$0xff]
    %v66 = vld [vmem:[#allocation2 + $0x50] sm:$0xff]
    %v67 = vld [vmem:[#allocation2 + $0x58] sm:$0xff]
    %v68 = vld [vmem:[#allocation2 + $0x60] sm:$0xff]
    %v69 = vld [vmem:[#allocation2 + $0x68] sm:$0xff]
    %v70 = vld [vmem:[#allocation2 + $0x70] sm:$0xff]
    %v71 = vld [vmem:[#allocation2 + $0x78] sm:$0xff]
    %v72 = vadd.f32 %v56, %v57
    %73 = vadd.xlane.f32.xlu0 %v72
    %v74 = vpop.xlane.xlu0 %73
    %v75 = vadd.f32 %v58, %v59
    %76 = vadd.xlane.f32.xlu0 %v75
    %v77 = vpop.xlane.xlu0 %76
    %v78 = vadd.f32 %v60, %v61
    %79 = vadd.xlane.f32.xlu0 %v78
    %v80 = vpop.xlane.xlu0 %79
    %v81 = vadd.f32 %v62, %v63
    %82 = vadd.xlane.f32.xlu0 %v81
    %v83 = vpop.xlane.xlu0 %82
    %v84 = vadd.f32 %v64, %v65
    %85 = vadd.xlane.f32.xlu0 %v84
    %v86 = vpop.xlane.xlu0 %85
    %v87 = vadd.f32 %v66, %v67
    %88 = vadd.xlane.f32.xlu0 %v87
    %v89 = vpop.xlane.xlu0 %88
    %v90 = vadd.f32 %v68, %v69
    %91 = vadd.xlane.f32.xlu0 %v90
    %v92 = vpop.xlane.xlu0 %91
    %v93 = vadd.f32 %v70, %v71
    %94 = vadd.xlane.f32.xlu0 %v93
    %v95 = vpop.xlane.xlu0 %94
    %v96 = vmul.f32 %v74, 0.00390625
    %v97 = vmul.f32 %v77, 0.00390625
    %v98 = vmul.f32 %v80, 0.00390625
    %v99 = vmul.f32 %v83, 0.00390625
    %v100 = vmul.f32 %v86, 0.00390625
    %v101 = vmul.f32 %v89, 0.00390625
    %v102 = vmul.f32 %v92, 0.00390625
    %v103 = vmul.f32 %v95, 0.00390625
    %v104 = vmax.f32 %v56, %v57
    %105 = vmax.xlane.f32.xlu0 %v104
    %v106 = vpop.xlane.xlu0 %105
    %v107 = vmax.f32 %v58, %v59
    %108 = vmax.xlane.f32.xlu0 %v107
    %v109 = vpop.xlane.xlu0 %108
    %v110 = vmax.f32 %v60, %v61
    %111 = vmax.xlane.f32.xlu0 %v110
    %v112 = vpop.xlane.xlu0 %111
    %v113 = vmax.f32 %v62, %v63
    %114 = vmax.xlane.f32.xlu0 %v113
    %v115 = vpop.xlane.xlu0 %114
    %v116 = vmax.f32 %v64, %v65
    %117 = vmax.xlane.f32.xlu0 %v116
    %v118 = vpop.xlane.xlu0 %117
    %v119 = vmax.f32 %v66, %v67
    %120 = vmax.xlane.f32.xlu0 %v119
    %v121 = vpop.xlane.xlu0 %120
    %v122 = vmax.f32 %v68, %v69
    %123 = vmax.xlane.f32.xlu0 %v122
    %v124 = vpop.xlane.xlu0 %123
    %v125 = vmax.f32 %v70, %v71
    %126 = vmax.xlane.f32.xlu0 %v125
    %v127 = vpop.xlane.xlu0 %126
    %v128 = vld [vmem:[#allocation5] sm:$0xff]
    %v129 = vld [vmem:[#allocation5 + $0x8] sm:$0xff]
    %v130 = vld [vmem:[#allocation5 + $0x10] sm:$0xff]
    %v131 = vld [vmem:[#allocation5 + $0x18] sm:$0xff]
    %v132 = vld [vmem:[#allocation7] sm:$0xff]
    %v133 = vld [vmem:[#allocation7 + $0x8] sm:$0xff]
    %v134 = vld [vmem:[#allocation7 + $0x10] sm:$0xff]
    %v135 = vld [vmem:[#allocation7 + $0x18] sm:$0xff]
    %v144 = vlaneseq
    %v145 = vand.u32 %v144, 127
    %v146 = vlaneseq
    %v147 = vshrl.u32 %v146, 7
    %v148 = vsub.s32 %v145, %v147
    %v149 = vrot.slane %v96, %v148
    %v150 = vadd.s32 %v145, 4294967288
    %v151 = vlaneseq
    %v152 = vshrl.u32 %v151, 7
    %v153 = vsub.s32 %v150, %v152
    %v154 = vrot.slane %v97, %v153
    %vm155 = vcmask 130112
    %v156 = vsel %vm155, %v154, %v149
    %v157 = vadd.s32 %v145, 4294967280
    %v158 = vlaneseq
    %v159 = vshrl.u32 %v158, 7
    %v160 = vsub.s32 %v157, %v159
    %v161 = vrot.slane %v98, %v160
    %vm162 = vcmask 195712
    %v163 = vsel %vm162, %v161, %v156
    %v164 = vadd.s32 %v145, 4294967272
    %v165 = vlaneseq
    %v166 = vshrl.u32 %v165, 7
    %v167 = vsub.s32 %v164, %v166
    %v168 = vrot.slane %v99, %v167
    %vm169 = vcmask 261312
    %v170 = vsel %vm169, %v168, %v163
    %v171 = vlaneseq
    %v172 = vshrl.u32 %v171, 7
    %v173 = vsub.s32 %v145, %v172
    %v174 = vrot.slane %v100, %v173
    %v175 = vlaneseq
    %v176 = vshrl.u32 %v175, 7
    %v177 = vsub.s32 %v150, %v176
    %v178 = vrot.slane %v101, %v177
    %v179 = vsel %vm155, %v178, %v174
    %v180 = vlaneseq
    %v181 = vshrl.u32 %v180, 7
    %v182 = vsub.s32 %v157, %v181
    %v183 = vrot.slane %v102, %v182
    %v184 = vsel %vm162, %v183, %v179
    %v185 = vlaneseq
    %v186 = vshrl.u32 %v185, 7
    %v187 = vsub.s32 %v164, %v186
    %v188 = vrot.slane %v103, %v187
    %v189 = vsel %vm169, %v188, %v184
    %vm190 = vcmask 1041409
    %v191 = vsel %vm190, %v189, %v170
    %vm192 = vcmask 261120
    %v193 = vsel %vm192, %v191, 0
    %195 = vmatprep.subr.mxu0 0.0
    %196 = vmatpush1.msra.mxu0 %v128
    %197 = vmatprep.subr.mxu0 0.0
    %198 = vmatpush1.msra.mxu0 %v129
    %199 = vmatprep.subr.mxu0 0.0
    %200 = vmatpush1.msra.mxu0 %v130
    %201 = vmatprep.subr.mxu0 0.0
    %202 = vmatpush1.msra.mxu0 %v131
    %203 = vmatprep.subr.mxu0 0.0
    %204 = vmatpush1.msra.mxu0 0.0
    %205 = vmatprep.subr.mxu0 0.0
    %206 = vmatpush1.msra.mxu0 0.0
    %207 = vmatprep.subr.mxu0 0.0
    %208 = vmatpush1.msra.mxu0 0.0
    %209 = vmatprep.subr.mxu0 0.0
    %210 = vmatpush1.msra.mxu0 0.0
    %211 = vmatprep.subr.mxu0 0.0
    %212 = vmatpush1.msra.mxu0 0.0
    %213 = vmatprep.subr.mxu0 0.0
    %214 = vmatpush1.msra.mxu0 0.0
    %215 = vmatprep.subr.mxu0 0.0
    %216 = vmatpush1.msra.mxu0 0.0
    %217 = vmatprep.subr.mxu0 0.0
    %218 = vmatpush1.msra.mxu0 0.0
    %219 = vmatprep.subr.mxu0 0.0
    %220 = vmatpush1.msra.mxu0 0.0
    %221 = vmatprep.subr.mxu0 0.0
    %222 = vmatpush1.msra.mxu0 0.0
    %223 = vmatprep.subr.mxu0 0.0
    %224 = vmatpush1.msra.mxu0 0.0
    %225 = vmatprep.subr.mxu0 0.0
    %226 = vmatpush1.msra.mxu0 0.0
    %227 = vmatprep.subr.mxu0 0.0
    %228 = vmatpush1.msra.mxu0 0.0
    %229 = vmatprep.subr.mxu0 0.0
    %230 = vmatpush1.msra.mxu0 0.0
    %231 = vmatprep.subr.mxu0 0.0
    %232 = vmatpush1.msra.mxu0 0.0
    %233 = vmatprep.subr.mxu0 0.0
    %234 = vmatpush1.msra.mxu0 0.0
    %235 = vmatprep.subr.mxu0 0.0
    %236 = vmatpush1.msra.mxu0 0.0
    %237 = vmatprep.subr.mxu0 0.0
    %238 = vmatpush1.msra.mxu0 0.0
    %239 = vmatprep.subr.mxu0 0.0
    %240 = vmatpush1.msra.mxu0 0.0
    %241 = vmatprep.subr.mxu0 0.0
    %242 = vmatpush1.msra.mxu0 0.0
    %243 = vmatprep.subr.mxu0 0.0
    %244 = vmatpush1.msra.mxu0 0.0
    %245 = vmatprep.subr.mxu0 0.0
    %246 = vmatpush1.msra.mxu0 0.0
    %247 = vmatprep.subr.mxu0 0.0
    %248 = vmatpush1.msra.mxu0 0.0
    %249 = vmatprep.subr.mxu0 0.0
    %250 = vmatpush1.msra.mxu0 0.0
    %251 = vmatprep.subr.mxu0 0.0
    %252 = vmatpush1.msra.mxu0 0.0
    %253 = vmatprep.subr.mxu0 0.0
    %254 = vmatpush1.msra.mxu0 0.0
    %255 = vmatprep.subr.mxu0 0.0
    %256 = vmatpush1.msra.mxu0 0.0
    %257 = vmatprep.subr.mxu0 0.0
    %258 = vmatpush1.msra.mxu0 0.0
    %259 = vmatprep.mubr.f32.mxu0 0.0
    %260 = vmatmul.mubr.f32.gmra.mrb[0].mxu0 %v193
    %v261 = vpop.f32.mrb[0].mxu0
    %v262 = vadd.f32 0.0, %v261
    %v263 = vpop.f32.mrb[0].mxu0
    %264 = vdwg.mxu0
    %v265 = vmax.f32 %v262, 0.0
    %v274 = vlaneseq
    %v275 = vshrl.u32 %v274, 7
    %v276 = vsub.s32 %v145, %v275
    %v277 = vrot.slane %v106, %v276
    %v278 = vlaneseq
    %v279 = vshrl.u32 %v278, 7
    %v280 = vsub.s32 %v150, %v279
    %v281 = vrot.slane %v109, %v280
    %v282 = vsel %vm155, %v281, %v277
    %v283 = vlaneseq
    %v284 = vshrl.u32 %v283, 7
    %v285 = vsub.s32 %v157, %v284
    %v286 = vrot.slane %v112, %v285
    %v287 = vsel %vm162, %v286, %v282
    %v288 = vlaneseq
    %v289 = vshrl.u32 %v288, 7
    %v290 = vsub.s32 %v164, %v289
    %v291 = vrot.slane %v115, %v290
    %v292 = vsel %vm169, %v291, %v287
    %v293 = vlaneseq
    %v294 = vshrl.u32 %v293, 7
    %v295 = vsub.s32 %v145, %v294
    %v296 = vrot.slane %v118, %v295
    %v297 = vlaneseq
    %v298 = vshrl.u32 %v297, 7
    %v299 = vsub.s32 %v150, %v298
    %v300 = vrot.slane %v121, %v299
    %v301 = vsel %vm155, %v300, %v296
    %v302 = vlaneseq
    %v303 = vshrl.u32 %v302, 7
    %v304 = vsub.s32 %v157, %v303
    %v305 = vrot.slane %v124, %v304
    %v306 = vsel %vm162, %v305, %v301
    %v307 = vlaneseq
    %v308 = vshrl.u32 %v307, 7
    %v309 = vsub.s32 %v164, %v308
    %v310 = vrot.slane %v127, %v309
    %v311 = vsel %vm169, %v310, %v306
    %v312 = vsel %vm190, %v311, %v292
    %v313 = vsel %vm192, %v312, 0
    %315 = vmatprep.subr.mxu0 0.0
    %316 = vmatpush1.msra.mxu0 %v128
    %317 = vmatprep.subr.mxu0 0.0
    %318 = vmatpush1.msra.mxu0 %v129
    %319 = vmatprep.subr.mxu0 0.0
    %320 = vmatpush1.msra.mxu0 %v130
    %321 = vmatprep.subr.mxu0 0.0
    %322 = vmatpush1.msra.mxu0 %v131
    %323 = vmatprep.subr.mxu0 0.0
    %324 = vmatpush1.msra.mxu0 0.0
    %325 = vmatprep.subr.mxu0 0.0
    %326 = vmatpush1.msra.mxu0 0.0
    %327 = vmatprep.subr.mxu0 0.0
    %328 = vmatpush1.msra.mxu0 0.0
    %329 = vmatprep.subr.mxu0 0.0
    %330 = vmatpush1.msra.mxu0 0.0
    %331 = vmatprep.subr.mxu0 0.0
    %332 = vmatpush1.msra.mxu0 0.0
    %333 = vmatprep.subr.mxu0 0.0
    %334 = vmatpush1.msra.mxu0 0.0
    %335 = vmatprep.subr.mxu0 0.0
    %336 = vmatpush1.msra.mxu0 0.0
    %337 = vmatprep.subr.mxu0 0.0
    %338 = vmatpush1.msra.mxu0 0.0
    %339 = vmatprep.subr.mxu0 0.0
    %340 = vmatpush1.msra.mxu0 0.0
    %341 = vmatprep.subr.mxu0 0.0
    %342 = vmatpush1.msra.mxu0 0.0
    %343 = vmatprep.subr.mxu0 0.0
    %344 = vmatpush1.msra.mxu0 0.0
    %345 = vmatprep.subr.mxu0 0.0
    %346 = vmatpush1.msra.mxu0 0.0
    %347 = vmatprep.subr.mxu0 0.0
    %348 = vmatpush1.msra.mxu0 0.0
    %349 = vmatprep.subr.mxu0 0.0
    %350 = vmatpush1.msra.mxu0 0.0
    %351 = vmatprep.subr.mxu0 0.0
    %352 = vmatpush1.msra.mxu0 0.0
    %353 = vmatprep.subr.mxu0 0.0
    %354 = vmatpush1.msra.mxu0 0.0
    %355 = vmatprep.subr.mxu0 0.0
    %356 = vmatpush1.msra.mxu0 0.0
    %357 = vmatprep.subr.mxu0 0.0
    %358 = vmatpush1.msra.mxu0 0.0
    %359 = vmatprep.subr.mxu0 0.0
    %360 = vmatpush1.msra.mxu0 0.0
    %361 = vmatprep.subr.mxu0 0.0
    %362 = vmatpush1.msra.mxu0 0.0
    %363 = vmatprep.subr.mxu0 0.0
    %364 = vmatpush1.msra.mxu0 0.0
    %365 = vmatprep.subr.mxu0 0.0
    %366 = vmatpush1.msra.mxu0 0.0
    %367 = vmatprep.subr.mxu0 0.0
    %368 = vmatpush1.msra.mxu0 0.0
    %369 = vmatprep.subr.mxu0 0.0
    %370 = vmatpush1.msra.mxu0 0.0
    %371 = vmatprep.subr.mxu0 0.0
    %372 = vmatpush1.msra.mxu0 0.0
    %373 = vmatprep.subr.mxu0 0.0
    %374 = vmatpush1.msra.mxu0 0.0
    %375 = vmatprep.subr.mxu0 0.0
    %376 = vmatpush1.msra.mxu0 0.0
    %377 = vmatprep.subr.mxu0 0.0
    %378 = vmatpush1.msra.mxu0 0.0
    %379 = vmatprep.mubr.f32.mxu0 0.0
    %380 = vmatmul.mubr.f32.gmra.mrb[0].mxu0 %v313
    %v381 = vpop.f32.mrb[0].mxu0
    %v382 = vadd.f32 0.0, %v381
    %v383 = vpop.f32.mrb[0].mxu0
    %384 = vdwg.mxu0
    %v385 = vmax.f32 %v382, 0.0
    %v387 = vsel %vm192, %v385, 0
    %389 = vmatprep.subr.mxu0 0.0
    %390 = vmatpush1.msra.mxu0 %v132
    %391 = vmatprep.subr.mxu0 0.0
    %392 = vmatpush1.msra.mxu0 %v133
    %393 = vmatprep.subr.mxu0 0.0
    %394 = vmatpush1.msra.mxu0 %v134
    %395 = vmatprep.subr.mxu0 0.0
    %396 = vmatpush1.msra.mxu0 %v135
    %397 = vmatprep.subr.mxu0 0.0
    %398 = vmatpush1.msra.mxu0 0.0
    %399 = vmatprep.subr.mxu0 0.0
    %400 = vmatpush1.msra.mxu0 0.0
    %401 = vmatprep.subr.mxu0 0.0
    %402 = vmatpush1.msra.mxu0 0.0
    %403 = vmatprep.subr.mxu0 0.0
    %404 = vmatpush1.msra.mxu0 0.0
    %405 = vmatprep.subr.mxu0 0.0
    %406 = vmatpush1.msra.mxu0 0.0
    %407 = vmatprep.subr.mxu0 0.0
    %408 = vmatpush1.msra.mxu0 0.0
    %409 = vmatprep.subr.mxu0 0.0
    %410 = vmatpush1.msra.mxu0 0.0
    %411 = vmatprep.subr.mxu0 0.0
    %412 = vmatpush1.msra.mxu0 0.0
    %413 = vmatprep.subr.mxu0 0.0
    %414 = vmatpush1.msra.mxu0 0.0
    %415 = vmatprep.subr.mxu0 0.0
    %416 = vmatpush1.msra.mxu0 0.0
    %417 = vmatprep.subr.mxu0 0.0
    %418 = vmatpush1.msra.mxu0 0.0
    %419 = vmatprep.subr.mxu0 0.0
    %420 = vmatpush1.msra.mxu0 0.0
    %421 = vmatprep.subr.mxu0 0.0
    %422 = vmatpush1.msra.mxu0 0.0
    %423 = vmatprep.subr.mxu0 0.0
    %424 = vmatpush1.msra.mxu0 0.0
    %425 = vmatprep.subr.mxu0 0.0
    %426 = vmatpush1.msra.mxu0 0.0
    %427 = vmatprep.subr.mxu0 0.0
    %428 = vmatpush1.msra.mxu0 0.0
    %429 = vmatprep.subr.mxu0 0.0
    %430 = vmatpush1.msra.mxu0 0.0
    %431 = vmatprep.subr.mxu0 0.0
    %432 = vmatpush1.msra.mxu0 0.0
    %433 = vmatprep.subr.mxu0 0.0
    %434 = vmatpush1.msra.mxu0 0.0
    %435 = vmatprep.subr.mxu0 0.0
    %436 = vmatpush1.msra.mxu0 0.0
    %437 = vmatprep.subr.mxu0 0.0
    %438 = vmatpush1.msra.mxu0 0.0
    %439 = vmatprep.subr.mxu0 0.0
    %440 = vmatpush1.msra.mxu0 0.0
    %441 = vmatprep.subr.mxu0 0.0
    %442 = vmatpush1.msra.mxu0 0.0
    %443 = vmatprep.subr.mxu0 0.0
    %444 = vmatpush1.msra.mxu0 0.0
    %445 = vmatprep.subr.mxu0 0.0
    %446 = vmatpush1.msra.mxu0 0.0
    %447 = vmatprep.subr.mxu0 0.0
    %448 = vmatpush1.msra.mxu0 0.0
    %449 = vmatprep.subr.mxu0 0.0
    %450 = vmatpush1.msra.mxu0 0.0
    %451 = vmatprep.subr.mxu0 0.0
    %452 = vmatpush1.msra.mxu0 0.0
    %453 = vmatprep.mubr.f32.mxu0 0.0
    %454 = vmatmul.mubr.f32.gmra.mrb[0].mxu0 %v387
    %v455 = vpop.f32.mrb[0].mxu0
    %v456 = vadd.f32 0.0, %v455
    %v457 = vpop.f32.mrb[0].mxu0
    %458 = vdwg.mxu0
    %v460 = vsel %vm192, %v265, 0
    %462 = vmatprep.subr.mxu0 0.0
    %463 = vmatpush1.msra.mxu0 %v132
    %464 = vmatprep.subr.mxu0 0.0
    %465 = vmatpush1.msra.mxu0 %v133
    %466 = vmatprep.subr.mxu0 0.0
    %467 = vmatpush1.msra.mxu0 %v134
    %468 = vmatprep.subr.mxu0 0.0
    %469 = vmatpush1.msra.mxu0 %v135
    %470 = vmatprep.subr.mxu0 0.0
    %471 = vmatpush1.msra.mxu0 0.0
    %472 = vmatprep.subr.mxu0 0.0
    %473 = vmatpush1.msra.mxu0 0.0
    %474 = vmatprep.subr.mxu0 0.0
    %475 = vmatpush1.msra.mxu0 0.0
    %476 = vmatprep.subr.mxu0 0.0
    %477 = vmatpush1.msra.mxu0 0.0
    %478 = vmatprep.subr.mxu0 0.0
    %479 = vmatpush1.msra.mxu0 0.0
    %480 = vmatprep.subr.mxu0 0.0
    %481 = vmatpush1.msra.mxu0 0.0
    %482 = vmatprep.subr.mxu0 0.0
    %483 = vmatpush1.msra.mxu0 0.0
    %484 = vmatprep.subr.mxu0 0.0
    %485 = vmatpush1.msra.mxu0 0.0
    %486 = vmatprep.subr.mxu0 0.0
    %487 = vmatpush1.msra.mxu0 0.0
    %488 = vmatprep.subr.mxu0 0.0
    %489 = vmatpush1.msra.mxu0 0.0
    %490 = vmatprep.subr.mxu0 0.0
    %491 = vmatpush1.msra.mxu0 0.0
    %492 = vmatprep.subr.mxu0 0.0
    %493 = vmatpush1.msra.mxu0 0.0
    %494 = vmatprep.subr.mxu0 0.0
    %495 = vmatpush1.msra.mxu0 0.0
    %496 = vmatprep.subr.mxu0 0.0
    %497 = vmatpush1.msra.mxu0 0.0
    %498 = vmatprep.subr.mxu0 0.0
    %499 = vmatpush1.msra.mxu0 0.0
    %500 = vmatprep.subr.mxu0 0.0
    %501 = vmatpush1.msra.mxu0 0.0
    %502 = vmatprep.subr.mxu0 0.0
    %503 = vmatpush1.msra.mxu0 0.0
    %504 = vmatprep.subr.mxu0 0.0
    %505 = vmatpush1.msra.mxu0 0.0
    %506 = vmatprep.subr.mxu0 0.0
    %507 = vmatpush1.msra.mxu0 0.0
    %508 = vmatprep.subr.mxu0 0.0
    %509 = vmatpush1.msra.mxu0 0.0
    %510 = vmatprep.subr.mxu0 0.0
    %511 = vmatpush1.msra.mxu0 0.0
    %512 = vmatprep.subr.mxu0 0.0
    %513 = vmatpush1.msra.mxu0 0.0
    %514 = vmatprep.subr.mxu0 0.0
    %515 = vmatpush1.msra.mxu0 0.0
    %516 = vmatprep.subr.mxu0 0.0
    %517 = vmatpush1.msra.mxu0 0.0
    %518 = vmatprep.subr.mxu0 0.0
    %519 = vmatpush1.msra.mxu0 0.0
    %520 = vmatprep.subr.mxu0 0.0
    %521 = vmatpush1.msra.mxu0 0.0
    %522 = vmatprep.subr.mxu0 0.0
    %523 = vmatpush1.msra.mxu0 0.0
    %524 = vmatprep.subr.mxu0 0.0
    %525 = vmatpush1.msra.mxu0 0.0
    %526 = vmatprep.mubr.f32.mxu0 0.0
    %527 = vmatmul.mubr.f32.gmra.mrb[0].mxu0 %v460
    %v528 = vpop.f32.mrb[0].mxu0
    %v529 = vadd.f32 %v456, %v528
    %v530 = vpop.f32.mrb[0].mxu0
    %531 = vdwg.mxu0
    %v532 = vxor.u32 %v529, 2147483648
    %v533 = vmul.f32 %v532, 1.442695
    %v534 = vpow.pop %v533
    %v535 = vadd.f32 %v534, 1.0
    %v536 = vrcp.pop %v535
    %v537 = vmul.f32 1.0, %v536
    %vm538 = vcmask 254976
    %539 = vst.msk [vmem:[#allocation8] sm:$0x3] %vm538, %v537
    // Predicated region
    $region26: #{tpu_custom_call.1} parent=1 // pred_check
      _
    $region27: #{tpu_custom_call.1} parent=1 // pred_check_branch
      %541 = sbr.rel (0) target = $region29
    $region28: #{tpu_custom_call.1} parent=1 // pred_region
      %s543 = ssub.s32 32, 32
      %544 = vsyncadd [#allocation4], %s543
      %s546 = sshll.u32 [#allocation8], 4
      %s547 = int_to_ptr.vmem [resolvable:$true] %s546
      %549 = dma.vmem_to_hbm [thread:$0]  %s547, 32, %s3, [#allocation4]
    $region29: #{tpu_custom_call.1} parent=1 // pred_fallthru
      _
    // Predicated region
    $region30: #{tpu_custom_call.1} parent=1 // pred_check
      _
    $region31: #{tpu_custom_call.1} parent=1 // pred_check_branch
      %551 = sbr.rel (0) target = $region33
    $region32: #{tpu_custom_call.1} parent=1 // pred_region
      %552 = dma.done [#allocation4], 32
    $region33: #{tpu_custom_call.1} parent=1 // pred_fallthru
      _
    %553 = vsyncpa [#allocation3], 1
    %554 = vsyncpa [#allocation6], 1
    %555 = vsyncpa [#allocation4], 1

</llo_original>
